<compile_context>
chip_gen: v7x
topology: tpu7x:2x2x1
jax: 0.10.0
libtpu: 0.0.40
codegen_flags: <defaults>
</compile_context>

<pallas_src>
import math

import jax
import jax.numpy as jnp
from jax.experimental import pallas as pl
from jax.experimental.pallas import tpu as pltpu


_VMEM_LIMIT_BYTES = 32 * 1024 * 1024   # safe scoped budget on v5e / v6e / v7x


def _cat_relu_kernel(x_ref, y_ref, o_ref):
    # x_ref: (TB, D1), y_ref: (TB, D2), o_ref: (TB, D1 + D2)
    # Build the concatenated row in registers, then issue ONE full-width,
    # lane-dense store instead of two lane-offset partial stores.
    zx = jnp.maximum(x_ref[...], 0).astype(o_ref.dtype)
    zy = jnp.maximum(y_ref[...], 0).astype(o_ref.dtype)
    o_ref[...] = jnp.concatenate([zx, zy], axis=-1)


def _sublane_multiple(dtype):
    # f32 -> 8, bf16 -> 16, int8/fp8 -> 32 (packed sublanes)
    bytes_per = jnp.dtype(dtype).itemsize
    return max(8, 8 * (4 // max(1, bytes_per)))


def _choose_row_tile(n_rows, d_out, dtype, target_bytes=512 * 1024):
    """Pick a row-tile so each output block is ~0.5 MiB (inputs add ~0.5 MiB),
    keeping 2x double-buffered footprint well under the scoped VMEM limit."""
    bytes_per = jnp.dtype(dtype).itemsize
    sub = _sublane_multiple(dtype)
    tb = max(sub, target_bytes // max(1, d_out * bytes_per))
    tb = max(sub, (tb // sub) * sub)
    if tb >= n_rows:
        return n_rows            # full extent: always a legal block size
    return tb                    # multiple of the sublane quantum


def cat_relu(x, y, *, force_pallas=False, min_pallas_elems=1 << 15):
    """relu(cat([x, y], axis=-1)).view([-1] + shape[-2:]), concat+relu in Pallas."""
    assert x.ndim >= 2 and y.ndim >= 2
    assert x.shape[:-1] == y.shape[:-1], "leading dims must match for cat(dim=-1)"

    d1 = x.shape[-1]
    d2 = y.shape[-1]
    d_out = d1 + d2
    out_dtype = jnp.promote_types(x.dtype, y.dtype)   # match torch.cat promotion
    n_rows = int(math.prod(x.shape[:-1]))
    # view([-1] + list(z.shape[-2:])): collapse every leading dim.
    final_shape = (-1, x.shape[-2], d_out)

    if (not force_pallas) and n_rows * d_out < min_pallas_elems:
        # Tiny inputs: pallas_call launch + grid-step overhead dominates;
        # XLA's fused elementwise path is strictly faster here.
        z = jnp.concatenate([x.astype(out_dtype), y.astype(out_dtype)], axis=-1)
        return jnp.maximum(z, 0).reshape(final_shape)

    x2 = x.reshape(n_rows, d1)
    y2 = y.reshape(n_rows, d2)

    tb = _choose_row_tile(n_rows, d_out, out_dtype)
    grid = (pl.cdiv(n_rows, tb),)

    out_bytes = jnp.dtype(out_dtype).itemsize
    cost = pl.CostEstimate(
        flops=n_rows * d_out,
        transcendentals=0,
        bytes_accessed=(x2.size * x2.dtype.itemsize
                        + y2.size * y2.dtype.itemsize
                        + n_rows * d_out * out_bytes),
    )

    out2d = pl.pallas_call(
        _cat_relu_kernel,
        out_shape=jax.ShapeDtypeStruct((n_rows, d_out), out_dtype),
        grid=grid,
        in_specs=[
            pl.BlockSpec((tb, d1), lambda i: (i, 0)),
            pl.BlockSpec((tb, d2), lambda i: (i, 0)),
        ],
        out_specs=pl.BlockSpec((tb, d_out), lambda i: (i, 0)),
        compiler_params=pltpu.CompilerParams(
            dimension_semantics=("parallel",),      # megacore-shardable on v7x
            vmem_limit_bytes=_VMEM_LIMIT_BYTES,
        ),
        cost_estimate=cost,
    )(x2, y2)

    return out2d.reshape(final_shape)


def _ref(x, y):
    out_dtype = jnp.promote_types(x.dtype, y.dtype)
    z = jnp.concatenate([x.astype(out_dtype), y.astype(out_dtype)], axis=-1)
    return jnp.maximum(z, 0).reshape((-1, x.shape[-2], z.shape[-1]))


if __name__ == "__main__":
    key = jax.random.PRNGKey(0)
    k1, k2, k3, k4, k5, k6 = jax.random.split(key, 6)

    # 1) Small shapes matching the module's example: x (2, 3), y (2, 4).
    #    Force the Pallas path so the kernel itself is exercised once.
    x = jax.random.normal(k1, (2, 3), dtype=jnp.float32)
    y = jax.random.normal(k2, (2, 4), dtype=jnp.float32)
    out = cat_relu(x, y, force_pallas=True)
    jax.block_until_ready(out)
    assert out.shape == (1, 2, 7), out.shape
    assert jnp.allclose(out, _ref(x, y)), "small-shape mismatch vs reference"

    # 2) Larger shapes to exercise the tiled, pipelined path (grid of 4 steps).
    xl = jax.random.normal(k3, (2048, 96), dtype=jnp.float32)
    yl = jax.random.normal(k4, (2048, 160), dtype=jnp.float32)
    outl = cat_relu(xl, yl)
    jax.block_until_ready(outl)
    assert outl.shape == (1, 2048, 256), outl.shape
    assert jnp.allclose(outl, _ref(xl, yl)), "large-shape mismatch vs reference"

    # 3) 3-D inputs: view([-1] + shape[-2:]) collapses the leading dims.
    x3 = jax.random.normal(k5, (2, 4, 5), dtype=jnp.float32)
    y3 = jax.random.normal(k6, (2, 4, 3), dtype=jnp.float32)
    out3 = cat_relu(x3, y3, force_pallas=True)
    jax.block_until_ready(out3)
    assert out3.shape == (2, 4, 8), out3.shape
    assert jnp.allclose(out3, _ref(x3, y3)), "3-D mismatch vs reference"

    print("KERNEL_OK")
</pallas_src>

<mosaic_0001>
module attributes {stable_mosaic.version = 11 : i64} {
  func.func @_cat_relu_kernel(%arg0: i32, %arg1: memref<2x3xf32, #tpu.memory_space<vmem>>, %arg2: memref<2x4xf32, #tpu.memory_space<vmem>>, %arg3: memref<2x7xf32, #tpu.memory_space<vmem>>) attributes {dimension_semantics = [#tpu.dimension_semantics<parallel>], iteration_bounds = array<i64: 1>, scalar_prefetch = 0 : i64, scratch_operands = 0 : i64, tpu.core_type = #tpu.core_type<tc>, window_params = [{transform_indices = @transform_0, window_bounds = array<i64: 2, 3>}, {transform_indices = @transform_1, window_bounds = array<i64: 2, 4>}, {transform_indices = @transform_2, window_bounds = array<i64: 2, 7>}]} {
    %c0 = arith.constant 0 : index
    %c0_0 = arith.constant 0 : index
    %0 = vector.load %arg1[%c0, %c0_0] : memref<2x3xf32, #tpu.memory_space<vmem>>, vector<2x3xf32>
    %cst = arith.constant 0.000000e+00 : f32
    %1 = vector.broadcast %cst : f32 to vector<2x3xf32>
    %2 = arith.maximumf %0, %1 : vector<2x3xf32>
    %c0_1 = arith.constant 0 : index
    %c0_2 = arith.constant 0 : index
    %3 = vector.load %arg2[%c0_1, %c0_2] : memref<2x4xf32, #tpu.memory_space<vmem>>, vector<2x4xf32>
    %cst_3 = arith.constant 0.000000e+00 : f32
    %4 = vector.broadcast %cst_3 : f32 to vector<2x4xf32>
    %5 = arith.maximumf %3, %4 : vector<2x4xf32>
    %6 = tpu.concatenate %2, %5 in 1 : vector<2x3xf32>, vector<2x4xf32> -> vector<2x7xf32>
    %c0_4 = arith.constant 0 : index
    %c0_5 = arith.constant 0 : index
    %7 = vector.load %arg3[%c0_4, %c0_5] : memref<2x7xf32, #tpu.memory_space<vmem>>, vector<2x7xf32>
    tpu.vector_store %arg3[%c0_4, %c0_5], %6 {strides = array<i32>} : memref<2x7xf32, #tpu.memory_space<vmem>>, vector<2x7xf32>,
    return
  }
  func.func @transform_0(%arg0: i32) -> (i32, i32) {
    %c0_i32 = arith.constant 0 : i32
    %c0_i32_0 = arith.constant 0 : i32
    return %arg0, %c0_i32 : i32, i32
  }
  func.func @transform_1(%arg0: i32) -> (i32, i32) {
    %c0_i32 = arith.constant 0 : i32
    %c0_i32_0 = arith.constant 0 : i32
    return %arg0, %c0_i32 : i32, i32
  }
  func.func @transform_2(%arg0: i32) -> (i32, i32) {
    %c0_i32 = arith.constant 0 : i32
    %c0_i32_0 = arith.constant 0 : i32
    return %arg0, %c0_i32 : i32, i32
  }
}

</mosaic_0001>

<llo_original>
// kernel: tpu_custom_call.1
$region0: #{tpu_custom_call.1}
  #allocation0 [shape = 'u32[]', space=smem, size = 0x4, offset = 0x4, fixed_abs, tag = 'smem constant byte address 0x4 - core index']
  #allocation1 [shape = 'u32[144,128]{1,0:T(1,128)}', space=vmem, size = 0x12000, scoped, tag = 'internal scratch']
  %s0 = inlined_call_operand.hbm [shape: f32[2,3], index: 0, kind: input, shape index: {}]
  %s1 = inlined_call_operand.vmem [shape: f32[2,4], index: 1, kind: input, shape index: {}]
  %s2 = inlined_call_operand.hbm [shape: f32[2,7], index: 2, kind: output, shape index: {}]
  %s3 = sld [smem:[#allocation0]]
  $region22: #{tpu_custom_call.1} parent=0
    _
  %s5 = ssub.s32 1, %s3
  %s6 = scalar_select 0, %s5, %s3
  $region1: #{tpu_custom_call.1} parent=0
    #allocation2 [shape = 'u8[1024]{0}', space=vmem, size = 0x400, scoped, tag = 'input window, operand 0, single buffered']
    #allocation3 [shape = 's32[1]{0}', space=sflag, size = 0x4, scoped, tag = 'scoped memory for tpu_custom_call.1']
    #allocation4 [shape = 's32[1]{0}', space=sflag, size = 0x4, scoped, tag = 'scoped memory for tpu_custom_call.1']
    #allocation5 [shape = 'u8[1024]{0}', space=vmem, size = 0x400, scoped, tag = 'output window, operand 0, single buffered']
    %7 = vsyncpa [#allocation3], 0
    %8 = vsyncpa [#allocation4], 0
    // Predicated region
    $region2: #{tpu_custom_call.1} parent=1 // pred_check
      _
    $region3: #{tpu_custom_call.1} parent=1 // pred_check_branch
      %10 = sbr.rel (0) target = $region5
    $region4: #{tpu_custom_call.1} parent=1 // pred_region
      %s12 = ssub.s32 32, 32
      %13 = vsyncadd [#allocation3], %s12
      %s15 = sshll.u32 [#allocation2], 4
      %s16 = int_to_ptr.vmem [resolvable:$true] %s15
      %18 = dma.hbm_to_vmem [thread:$0]  %s0, 32, %s16, [#allocation3]
    $region5: #{tpu_custom_call.1} parent=1 // pred_fallthru
      _
    // Predicated region
    $region6: #{tpu_custom_call.1} parent=1 // pred_check
      _
    $region7: #{tpu_custom_call.1} parent=1 // pred_check_branch
      %20 = sbr.rel (0) target = $region9
    $region8: #{tpu_custom_call.1} parent=1 // pred_region
      _
    $region9: #{tpu_custom_call.1} parent=1 // pred_fallthru
      _
    // Predicated region
    $region10: #{tpu_custom_call.1} parent=1 // pred_check
      _
    $region11: #{tpu_custom_call.1} parent=1 // pred_check_branch
      %22 = sbr.rel (0) target = $region13
    $region12: #{tpu_custom_call.1} parent=1 // pred_region
      %23 = dma.done [#allocation3], 32
    $region13: #{tpu_custom_call.1} parent=1 // pred_fallthru
      _
    %v24 = vld [vmem:[#allocation2] sm:$0x3]
    %v25 = vmax.f32 %v24, 0.0
    %v26 = vld [vmem:[%s1] sm:$0x3]
    %v27 = vmax.f32 %v26, 0.0
    %29 = vrot.lane.b32.xlu0 %v27, 3
    %v30 = vpop.permute.xlu0 %29
    %vm32 = vcmask 23552
    %v33 = vsel %vm32, %v25, %v30
    %vm34 = vcmask 50176
    %35 = vst.msk [vmem:[#allocation5] sm:$0x3] %vm34, %v33
    // Predicated region
    $region14: #{tpu_custom_call.1} parent=1 // pred_check
      _
    $region15: #{tpu_custom_call.1} parent=1 // pred_check_branch
      %37 = sbr.rel (0) target = $region17
    $region16: #{tpu_custom_call.1} parent=1 // pred_region
      %s39 = ssub.s32 32, 32
      %40 = vsyncadd [#allocation4], %s39
      %s42 = sshll.u32 [#allocation5], 4
      %s43 = int_to_ptr.vmem [resolvable:$true] %s42
      %45 = dma.vmem_to_hbm [thread:$0]  %s43, 32, %s2, [#allocation4]
    $region17: #{tpu_custom_call.1} parent=1 // pred_fallthru
      _
    // Predicated region
    $region18: #{tpu_custom_call.1} parent=1 // pred_check
      _
    $region19: #{tpu_custom_call.1} parent=1 // pred_check_branch
      %47 = sbr.rel (0) target = $region21
    $region20: #{tpu_custom_call.1} parent=1 // pred_region
      %48 = dma.done [#allocation4], 32
    $region21: #{tpu_custom_call.1} parent=1 // pred_fallthru
      _
    %49 = vsyncpa [#allocation3], 1
    %50 = vsyncpa [#allocation4], 1

</llo_original>
